<compile_context>
chip_gen: v7x
topology: tpu7x:2x2x1
jax: 0.10.0
libtpu: 0.0.40
codegen_flags: <defaults>
</compile_context>

<pallas_src>
import numpy as np
import jax
import jax.numpy as jnp
from jax import lax
from jax.experimental import pallas as pl
from jax.experimental.pallas import tpu as pltpu


# ----------------------------------------------------------------------------
# Host-side (glue) construction of the pre-computed PPR matrix, dense numpy
# (mirrors calc_A_hat / calc_pre_PPR_mat, just without scipy.sparse).
# ----------------------------------------------------------------------------
def calc_A_hat_dense(adj_matrix: np.ndarray) -> np.ndarray:
    nnodes = adj_matrix.shape[0]
    A = adj_matrix + np.eye(nnodes, dtype=np.float64)
    D_vec = A.sum(axis=1)
    D_vec_invsqrt = 1.0 / np.sqrt(D_vec)
    return (D_vec_invsqrt[:, None] * A) * D_vec_invsqrt[None, :]


def calc_pre_PPR_mat_dense(A_mat: np.ndarray, alpha: float, niter: int) -> np.ndarray:
    N = A_mat.shape[0]
    pre_PPR_mat = alpha * np.eye(N, dtype=np.float64)
    A_mat_power = A_mat
    for i in range(1, niter):
        pre_PPR_mat = pre_PPR_mat + alpha * (1 - alpha) ** i * A_mat_power
        A_mat_power = A_mat_power @ A_mat
    pre_PPR_mat = pre_PPR_mat + (1 - alpha) ** niter * A_mat_power
    return pre_PPR_mat


def _round_up(x: int, m: int) -> int:
    return (x + m - 1) // m * m


# ----------------------------------------------------------------------------
# Pallas kernel: fused row-gather (manual per-row DMAs from HBM, driven by the
# scalar-prefetched idx) + bf16 MXU matmul with f32 accumulation.
# ----------------------------------------------------------------------------
def _ppr_gather_matmul_kernel(idx_ref,   # SMEM (Mp,) int32   [scalar prefetch]
                              p_hbm,     # ANY  (Np, Kp) f32  whole PPR matrix
                              x_ref,     # VMEM (Kp, tn) bf16 resident X tile
                              o_ref,     # VMEM (tm, tn) f32  output tile
                              p_buf,     # VMEM scratch (tm, Kp) f32
                              sem):      # DMA semaphore (1,)
    i = pl.program_id(0)      # output-row (idx) tile
    j = pl.program_id(1)      # F tile
    tm = p_buf.shape[0]

    # Gather the tm PPR rows of this output tile once (j == 0); reuse the
    # resident VMEM copy for every subsequent F tile of the same i.
    @pl.when(j == 0)
    def _gather():
        base = i * tm

        def _start(r, carry):
            row = idx_ref[base + r]
            pltpu.make_async_copy(p_hbm.at[row], p_buf.at[r], sem.at[0]).start()
            return carry

        lax.fori_loop(0, tm, _start, 0)

        def _wait(r, carry):
            # All started copies have identical (Kp,) shape; drain the shared
            # semaphore with one matching-shape wait per row.
            pltpu.make_async_copy(p_hbm.at[0], p_buf.at[r], sem.at[0]).wait()
            return carry

        lax.fori_loop(0, tm, _wait, 0)

    # Single full-K contraction block: no accumulation loop, plain overwrite.
    o_ref[...] = jnp.dot(p_buf[...].astype(jnp.bfloat16), x_ref[...],
                         preferred_element_type=jnp.float32)


# ----------------------------------------------------------------------------
# Tiling / VMEM policy.
# ----------------------------------------------------------------------------
def _vmem_limit_bytes() -> int:
    """~3/4 of physical VMEM (96 MiB on 128-MiB v5e/v6e, 48 MiB on 64-MiB v7x);
    conservative fallback when the hardware query is unavailable."""
    try:
        cap = int(pltpu.get_tpu_info().vmem_capacity_bytes)
    except Exception:
        cap = 64 * 1024 * 1024
    return min((cap * 3) // 4, 96 * 1024 * 1024)


def _pick_tiles(M: int, Kp: int, Fp: int, vmem_limit: int):
    # Explicit, double-buffer-aware VMEM accounting (per the review).
    def vmem_use(tm, tn):
        return (tm * Kp * 4            # gathered-row scratch (f32, single buffer)
                + 2 * Kp * tn * 2      # X block, bf16, double-buffered
                + 2 * tm * tn * 4)     # out block, f32, double-buffered

    budget = (vmem_limit * 8) // 10    # headroom for compiler-internal scratch

    tm = 256 if M >= 512 else 128      # 256-row tiles feed the 256-wide MXU
    if Fp <= 512:
        tn = Fp
    elif Fp % 512 == 0:
        tn = 512
    elif Fp % 256 == 0:
        tn = 256
    else:
        tn = 128

    if vmem_use(tm, tn) > budget and tm > 128:
        tm = 128
    if vmem_use(tm, tn) > budget and tn > 128:
        tn = 128
    # TODO(synk): add a K-tiled fallback (chunked row gather + accumulation)
    # for graphs where even (tm=128, tn=128) full-K blocks exceed VMEM.
    return tm, tn


# ----------------------------------------------------------------------------
# Wrapper: (pre_PPR_mat @ local_preds)[idx] with the gather fused in-kernel.
# ----------------------------------------------------------------------------
def ppr_propagate(p_mat: jax.Array, local_preds: jax.Array, idx: jax.Array) -> jax.Array:
    """p_mat: (Np, Kp) f32 column-padded PPR matrix (Kp % 128 == 0),
    local_preds: (N, F), idx: (M,) int  ->  (M, F) float32."""
    Np, Kp = p_mat.shape
    N, F = local_preds.shape
    M = idx.shape[0]

    Fp = _round_up(F, 128)
    vmem_limit = _vmem_limit_bytes()
    tm, tn = _pick_tiles(M, Kp, Fp, vmem_limit)
    Mp = _round_up(M, tm)

    # Pad idx (dummy row 0) instead of padding / gathering the big operand;
    # the extra output rows are sliced off below.
    idx_p = jnp.pad(idx.astype(jnp.int32), (0, Mp - M))

    # X is the small operand: per-call cast + pad is cheap.
    x = local_preds.astype(jnp.bfloat16)
    if (Kp, Fp) != (N, F):
        x = jnp.pad(x, ((0, Kp - N), (0, Fp - F)))

    grid = (Mp // tm, Fp // tn)

    out = pl.pallas_call(
        _ppr_gather_matmul_kernel,
        out_shape=jax.ShapeDtypeStruct((Mp, Fp), jnp.float32),
        grid_spec=pltpu.PrefetchScalarGridSpec(
            num_scalar_prefetch=1,
            grid=grid,
            in_specs=[
                pl.BlockSpec(memory_space=pl.ANY),                        # PPR matrix in HBM
                pl.BlockSpec((Kp, tn), lambda i, j, idx_sref: (0, j)),    # full-K X tile
            ],
            out_specs=pl.BlockSpec((tm, tn), lambda i, j, idx_sref: (i, j)),
            scratch_shapes=[
                pltpu.VMEM((tm, Kp), jnp.float32),
                pltpu.SemaphoreType.DMA((1,)),
            ],
        ),
        compiler_params=pltpu.CompilerParams(
            dimension_semantics=("parallel", "arbitrary"),
            vmem_limit_bytes=vmem_limit,
        ),
        cost_estimate=pl.CostEstimate(
            flops=2 * Mp * Kp * Fp,
            transcendentals=0,
            bytes_accessed=Mp * Kp * 4 + Kp * Fp * 2 + Mp * Fp * 4),
    )(idx_p, p_mat, x)

    return out[:M, :F]


# ----------------------------------------------------------------------------
# Module-equivalent wrapper.
# ----------------------------------------------------------------------------
class PrePPRIterationPallas:
    def __init__(self, adj_matrix: np.ndarray, alpha: float, niter: int):
        self.alpha = alpha
        self.niter = niter
        A_mat = calc_A_hat_dense(np.asarray(adj_matrix, dtype=np.float64))
        pre_PPR = calc_pre_PPR_mat_dense(A_mat, alpha, niter)
        N = pre_PPR.shape[0]
        self.n_nodes = N
        # Pad ONCE at init: columns to a lane-dense multiple of 128, rows to a
        # sublane multiple of 8.  Stored f32 so the PPR weights keep full
        # precision and per-row DMAs are 32-bit aligned; the bf16 cast happens
        # at the MXU inside the kernel.
        np_pad = _round_up(max(N, 8), 8)
        kp_pad = _round_up(N, 128)
        P = np.zeros((np_pad, kp_pad), dtype=np.float32)
        P[:N, :N] = pre_PPR
        self.pre_PPR_mat = jnp.asarray(P)

    def __call__(self, local_preds: jax.Array, idx: jax.Array) -> jax.Array:
        # Row-gather commutes with the left matmul: (P @ X)[idx] == P[idx] @ X.
        # The gather itself is fused into the kernel via scalar-prefetched idx
        # plus per-row DMAs from the HBM-resident PPR matrix.
        return ppr_propagate(self.pre_PPR_mat, local_preds, idx)


if __name__ == "__main__":
    key = jax.random.PRNGKey(0)
    k_adj, k_feat, k_idx = jax.random.split(key, 3)

    N_NODES = 256     # graph size
    F_DIM = 128       # prediction (class-logit) dimension
    M_IDX = 64        # number of queried node indices
    ALPHA = 0.1
    NITER = 10

    # Deterministic synthetic symmetric adjacency (no self-loops; A_hat adds I).
    upper = (jax.random.uniform(k_adj, (N_NODES, N_NODES)) < 0.05).astype(jnp.float32)
    adj = np.asarray(jnp.triu(upper, k=1))
    adj = adj + adj.T

    module = PrePPRIterationPallas(adj.astype(np.float64), ALPHA, NITER)

    local_preds = jax.random.normal(k_feat, (N_NODES, F_DIM), dtype=jnp.float32)
    idx = jax.random.permutation(k_idx, N_NODES)[:M_IDX]

    out = module(local_preds, idx)
    out = jax.block_until_ready(out)
    out_np = np.asarray(out)

    idx_np = np.asarray(idx)
    p_np = np.asarray(module.pre_PPR_mat)[:N_NODES, :N_NODES]
    x_np = np.asarray(local_preds)

    # Check 1: against f32 math on the same bf16-rounded operands
    # (isolates the fused gather + MXU path).
    p_q = np.asarray(jnp.asarray(p_np[idx_np], jnp.bfloat16), dtype=np.float32)
    x_q = np.asarray(jnp.asarray(x_np, jnp.bfloat16), dtype=np.float32)
    ref_q = p_q @ x_q
    np.testing.assert_allclose(out_np, ref_q, rtol=1e-4, atol=1e-4)

    # Check 2: against the full-precision forward of the original module
    # (loose tolerance: MXU operands are bf16-rounded).
    p_full = calc_pre_PPR_mat_dense(calc_A_hat_dense(adj.astype(np.float64)), ALPHA, NITER)
    ref = (p_full @ np.asarray(local_preds, dtype=np.float64))[idx_np]
    np.testing.assert_allclose(out_np, np.asarray(ref, dtype=np.float32),
                               rtol=3e-2, atol=3e-2)

    print("KERNEL_OK")
</pallas_src>

<mosaic_0001>
module attributes {stable_mosaic.version = 11 : i64} {
  func.func @_ppr_gather_matmul_kernel(%arg0: i32, %arg1: i32, %arg2: memref<128xi32, #tpu.memory_space<smem>>, %arg3: memref<256x256xf32, #tpu.memory_space<any>>, %arg4: memref<256x128xbf16, #tpu.memory_space<vmem>>, %arg5: memref<128x128xf32, #tpu.memory_space<vmem>>, %arg6: memref<128x256xf32, #tpu.memory_space<vmem>>, %arg7: memref<1x!tpu.dma_semaphore, #tpu.memory_space<semaphore_mem>>) attributes {dimension_semantics = [#tpu.dimension_semantics<parallel>, #tpu.dimension_semantics<arbitrary>], iteration_bounds = array<i64: 1, 1>, scalar_prefetch = 1 : i64, scratch_operands = 2 : i64, tpu.core_type = #tpu.core_type<tc>, window_params = [{}, {transform_indices = @transform_1, window_bounds = array<i64: 256, 128>}, {transform_indices = @transform_2, window_bounds = array<i64: 128, 128>}]} {
    %c0_i32 = arith.constant 0 : i32
    %0 = arith.cmpi eq, %arg1, %c0_i32 : i32
    %1 = arith.extui %0 : i1 to i32
    %c0_i32_0 = arith.constant 0 : i32
    %2 = arith.cmpi ne, %1, %c0_i32_0 : i32
    scf.if %2 {
      %c128_i32 = arith.constant 128 : i32
      %8 = arith.muli %arg0, %c128_i32 : i32
      %c0_i32_6 = arith.constant 0 : i32
      %c128_i32_7 = arith.constant 128 : i32
      %9 = arith.addi %c0_i32_6, %c128_i32_7 : i32
      %c1_i32 = arith.constant 1 : i32
      scf.for %arg8 = %c0_i32_6 to %9 step %c1_i32  : i32 {
        %11 = arith.addi %8, %arg8 : i32
        %12 = arith.index_cast %11 : i32 to index
        %13 = memref.load %arg2[%12] : memref<128xi32, #tpu.memory_space<smem>>
        %c0_i32_13 = arith.constant 0 : i32
        %c0_i32_14 = arith.constant 0 : i32
        %14 = tpu.memref_slice %arg3[%13, %c0_i32_14] : memref<256x256xf32, #tpu.memory_space<any>> -> memref<1x256xf32, #tpu.memory_space<any>>
        %15 = tpu.memref_squeeze %14 : memref<1x256xf32, #tpu.memory_space<any>> -> memref<256xf32, #tpu.memory_space<any>>
        %c0_i32_15 = arith.constant 0 : i32
        %16 = tpu.memref_slice %arg6[%arg8, %c0_i32_15] : memref<128x256xf32, #tpu.memory_space<vmem>> -> memref<1x256xf32, #tpu.memory_space<vmem>>
        %17 = tpu.memref_squeeze %16 : memref<1x256xf32, #tpu.memory_space<vmem>> -> memref<256xf32, #tpu.memory_space<vmem>>
        %18 = tpu.memref_slice %arg7[%c0_i32_13] : memref<1x!tpu.dma_semaphore, #tpu.memory_space<semaphore_mem>> -> memref<1x!tpu.dma_semaphore, #tpu.memory_space<semaphore_mem>>
        %19 = tpu.memref_squeeze %18 : memref<1x!tpu.dma_semaphore, #tpu.memory_space<semaphore_mem>> -> memref<!tpu.dma_semaphore, #tpu.memory_space<semaphore_mem>>
        tpu.enqueue_dma source(%15 : memref<256xf32, #tpu.memory_space<any>>) target(%17 : memref<256xf32, #tpu.memory_space<vmem>>) target_semaphore(%19 : memref<!tpu.dma_semaphore, #tpu.memory_space<semaphore_mem>>)
      }
      %c128_i32_8 = arith.constant 128 : i32
      %c0_i32_9 = arith.constant 0 : i32
      %c128_i32_10 = arith.constant 128 : i32
      %10 = arith.addi %c0_i32_9, %c128_i32_10 : i32
      %c1_i32_11 = arith.constant 1 : i32
      scf.for %arg8 = %c0_i32_9 to %10 step %c1_i32_11  : i32 {
        %c0_i32_13 = arith.constant 0 : i32
        %c0_i32_14 = arith.constant 0 : i32
        %c0_i32_15 = arith.constant 0 : i32
        %11 = tpu.memref_slice %arg3[%c0_i32_13, %c0_i32_15] : memref<256x256xf32, #tpu.memory_space<any>> -> memref<1x256xf32, #tpu.memory_space<any>>
        %12 = tpu.memref_squeeze %11 : memref<1x256xf32, #tpu.memory_space<any>> -> memref<256xf32, #tpu.memory_space<any>>
        %c0_i32_16 = arith.constant 0 : i32
        %13 = tpu.memref_slice %arg6[%arg8, %c0_i32_16] : memref<128x256xf32, #tpu.memory_space<vmem>> -> memref<1x256xf32, #tpu.memory_space<vmem>>
        %14 = tpu.memref_squeeze %13 : memref<1x256xf32, #tpu.memory_space<vmem>> -> memref<256xf32, #tpu.memory_space<vmem>>
        %15 = tpu.memref_slice %arg7[%c0_i32_14] : memref<1x!tpu.dma_semaphore, #tpu.memory_space<semaphore_mem>> -> memref<1x!tpu.dma_semaphore, #tpu.memory_space<semaphore_mem>>
        %16 = tpu.memref_squeeze %15 : memref<1x!tpu.dma_semaphore, #tpu.memory_space<semaphore_mem>> -> memref<!tpu.dma_semaphore, #tpu.memory_space<semaphore_mem>>
        tpu.wait_dma2 semaphore(%16 : memref<!tpu.dma_semaphore, #tpu.memory_space<semaphore_mem>>) src(%12 : memref<256xf32, #tpu.memory_space<any>>) dst(%14 : memref<256xf32, #tpu.memory_space<vmem>>)
      }
      %c128_i32_12 = arith.constant 128 : i32
    } else {
    }
    %c0 = arith.constant 0 : index
    %c0_1 = arith.constant 0 : index
    %3 = vector.load %arg6[%c0, %c0_1] : memref<128x256xf32, #tpu.memory_space<vmem>>, vector<128x256xf32>
    %4 = arith.truncf %3 : vector<128x256xf32> to vector<128x256xbf16>
    %c0_2 = arith.constant 0 : index
    %c0_3 = arith.constant 0 : index
    %5 = vector.load %arg4[%c0_2, %c0_3] : memref<256x128xbf16, #tpu.memory_space<vmem>>, vector<256x128xbf16>
    %cst = arith.constant dense<0.000000e+00> : vector<128x128xf32>
    %6 = tpu.matmul %4, %5, %cst {dimension_numbers = #tpu.dot_dimension_numbers<[1], [0], [0], [1], [0, 0, 1, 1], [], []>} : vector<128x256xbf16>, vector<256x128xbf16>, vector<128x128xf32> -> vector<128x128xf32>
    %c0_4 = arith.constant 0 : index
    %c0_5 = arith.constant 0 : index
    %7 = vector.load %arg5[%c0_4, %c0_5] : memref<128x128xf32, #tpu.memory_space<vmem>>, vector<128x128xf32>
    tpu.vector_store %arg5[%c0_4, %c0_5], %6 {strides = array<i32>} : memref<128x128xf32, #tpu.memory_space<vmem>>, vector<128x128xf32>,
    return
  }
  func.func @transform_1(%arg0: i32, %arg1: i32, %arg2: memref<128xi32, #tpu.memory_space<smem>>) -> (i32, i32) {
    %c0_i32 = arith.constant 0 : i32
    %c0_i32_0 = arith.constant 0 : i32
    return %c0_i32, %arg1 : i32, i32
  }
  func.func @transform_2(%arg0: i32, %arg1: i32, %arg2: memref<128xi32, #tpu.memory_space<smem>>) -> (i32, i32) {
    %c0_i32 = arith.constant 0 : i32
    return %arg0, %arg1 : i32, i32
  }
}

</mosaic_0001>

<llo_original>
// kernel: tpu_custom_call.1
$region0: #{tpu_custom_call.1}
  #allocation0 [shape = 'u32[]', space=smem, size = 0x4, offset = 0x4, fixed_abs, tag = 'smem constant byte address 0x4 - core index']
  #allocation1 [shape = 'u32[144,128]{1,0:T(1,128)}', space=vmem, size = 0x12000, scoped, tag = 'internal scratch']
  #allocation2 [shape = 'f32[128,256]{1,0:T(8,128)}', space=vmem, size = 0x20000, scoped, tag = 'scratch operand']
  #allocation3 [shape = 's32[1]{0}', space=sflag, size = 0x4, scoped, tag = 'scratch operand']
  #allocation4 [shape = 's32[1]{0}', space=sflag, size = 0x4, scoped, tag = 'scoped memory for tpu_custom_call.1']
  #allocation5 [shape = 'u8[512]{0}', space=smem, size = 0x200, scoped, tag = 'prefetched SMEM operand 0']
  #allocation10 [shape = 's32[]', space=sflag, size = 0x4, offset = 0, fixed_abs, tag = 'sflag constant byte address 0x0 - dummy sync flag']
  %s0 = inlined_call_operand.hbm [shape: s32[128], index: 0, kind: input, shape index: {}]
  %s1 = inlined_call_operand.hbm [shape: f32[256,256], index: 1, kind: input, shape index: {}]
  %s2 = inlined_call_operand.hbm [shape: bf16[256,128], index: 2, kind: input, shape index: {}]
  %s3 = inlined_call_operand.hbm [shape: f32[128,128], index: 3, kind: output, shape index: {}]
  %s4 = sld [smem:[#allocation0]]
  $region36: #{tpu_custom_call.1} parent=0
    _
  %s6 = ssub.s32 1, %s4
  %s7 = scalar_select 0, %s6, %s4
  %9 = dma.hbm_to_smem %s0, 16, [#allocation5], [#allocation4]
  %10 = dma.done [#allocation4], 16
  %11 = sfence
  $region1: #{tpu_custom_call.1} parent=0
    #allocation6 [shape = 'u8[65536]{0}', space=vmem, size = 0x10000, scoped, tag = 'input window, operand 2, single buffered']
    #allocation7 [shape = 's32[1]{0}', space=sflag, size = 0x4, scoped, tag = 'scoped memory for tpu_custom_call.1']
    #allocation8 [shape = 's32[1]{0}', space=sflag, size = 0x4, scoped, tag = 'scoped memory for tpu_custom_call.1']
    #allocation9 [shape = 'u8[65536]{0}', space=vmem, size = 0x10000, scoped, tag = 'output window, operand 0, single buffered']
    %12 = vsyncpa [#allocation7], 0
    %13 = vsyncpa [#allocation8], 0
    // Predicated region
    $region2: #{tpu_custom_call.1} parent=1 // pred_check
      _
    $region3: #{tpu_custom_call.1} parent=1 // pred_check_branch
      %15 = sbr.rel (0) target = $region5
    $region4: #{tpu_custom_call.1} parent=1 // pred_region
      %s17 = ssub.s32 2048, 2048
      %18 = vsyncadd [#allocation7], %s17
      %s19 = sshll.u32 [#allocation6], 4
      %s20 = int_to_ptr.vmem [resolvable:$true] %s19
      %25 = dma.hbm_to_vmem [thread:$0]  %s2, 2048, %s20, [#allocation7], 64, 64, 4
    $region5: #{tpu_custom_call.1} parent=1 // pred_fallthru
      _
    // Predicated region
    $region6: #{tpu_custom_call.1} parent=1 // pred_check
      _
    $region7: #{tpu_custom_call.1} parent=1 // pred_check_branch
      %27 = sbr.rel (0) target = $region9
    $region8: #{tpu_custom_call.1} parent=1 // pred_region
      %28 = dma.done [#allocation7], 2048
    $region9: #{tpu_custom_call.1} parent=1 // pred_fallthru
      _
    %p30 = scmp.eq.s32.totalorder 0, 0
    // Predicated region
    $region10: #{tpu_custom_call.1} parent=1 // pred_check
      %p31 = pneg %p30
    $region11: #{tpu_custom_call.1} parent=1 // pred_check_branch
      %33 = sbr.rel (%p31) target = $region13
    $region12: #{tpu_custom_call.1} parent=1 // pred_region
      %s34 = smul.u32 0, 128
      loop: start=0, step=1, limit=128
      $region14: #{tpu_custom_call.1} parent=12 // loop_pre_header
        _
      $region15: #{tpu_custom_call.1} parent=12 // loop_header
        %s36 = sphi 0, %s40
        %p37 = scmp.ge.s32.totalorder %s36, 128
      $region16: #{tpu_custom_call.1} parent=12 // loop_header_branch
        %39 = sbr.rel (%p37) target = $region20
      $region17: #{tpu_custom_call.1} parent=12 // loop_body
        %s41 = sadd.s32 %s34, %s36
        %s42 = sld [smem:[#allocation5 + %s41]]
        %s43 = sshrl.u32 %s42, 3
        %s44 = sand.u32 %s42, 7
        %s45 = smul.u32 %s43, 16
        %s46 = sadd.s32 %s44, %s45
        %s47 = smul.addr %s46, 16
        %s48 = scalar_lea.hbm %s1, %s47
        %s49 = sshrl.u32 %s36, 3
        %s50 = sand.u32 %s36, 7
        %s51 = smul.u32 %s49, 16
        %s52 = sadd.s32 %s50, %s51
        %s53 = scalar_lea.vmem [#allocation2], %s52
        %s55 = sshll.u32 %s53, 4
        %s56 = int_to_ptr.vmem [resolvable:$true] %s55
        %58 = dma.hbm_to_vmem [thread:$0]  %s48, 32, %s56, [#allocation3], 128, 128, 1
      $region18: #{tpu_custom_call.1} parent=12 // loop_footer
        %s40 = sadd.s32 1, %s36
      $region19: #{tpu_custom_call.1} parent=12 // loop_footer_branch
        %35 = sbr.rel target = $region15
      $region20: #{tpu_custom_call.1} parent=12 // loop_exit
        _
      loop: start=0, step=1, limit=128
      $region21: #{tpu_custom_call.1} parent=12 // loop_pre_header
        _
      $region22: #{tpu_custom_call.1} parent=12 // loop_header
        %s60 = sphi 0, %s64
        %p61 = scmp.ge.s32.totalorder %s60, 128
      $region23: #{tpu_custom_call.1} parent=12 // loop_header_branch
        %63 = sbr.rel (%p61) target = $region27
      $region24: #{tpu_custom_call.1} parent=12 // loop_body
        %66 = dma.done [#allocation3], 32
      $region25: #{tpu_custom_call.1} parent=12 // loop_footer
        %s64 = sadd.s32 1, %s60
      $region26: #{tpu_custom_call.1} parent=12 // loop_footer_branch
        %59 = sbr.rel target = $region22
      $region27: #{tpu_custom_call.1} parent=12 // loop_exit
        _
    $region13: #{tpu_custom_call.1} parent=1 // pred_fallthru
      _
    %v67 = vld [vmem:[#allocation2] sm:$0xff]
    %v68 = vld [vmem:[#allocation2 + $0x8] sm:$0xff]
    %v69 = vld [vmem:[#allocation2 + $0x10] sm:$0xff]
    %v70 = vld [vmem:[#allocation2 + $0x18] sm:$0xff]
    %v71 = vld [vmem:[#allocation2 + $0x20] sm:$0xff]
    %v72 = vld [vmem:[#allocation2 + $0x28] sm:$0xff]
    %v73 = vld [vmem:[#allocation2 + $0x30] sm:$0xff]
    %v74 = vld [vmem:[#allocation2 + $0x38] sm:$0xff]
    %v75 = vld [vmem:[#allocation2 + $0x40] sm:$0xff]
    %v76 = vld [vmem:[#allocation2 + $0x48] sm:$0xff]
    %v77 = vld [vmem:[#allocation2 + $0x50] sm:$0xff]
    %v78 = vld [vmem:[#allocation2 + $0x58] sm:$0xff]
    %v79 = vld [vmem:[#allocation2 + $0x60] sm:$0xff]
    %v80 = vld [vmem:[#allocation2 + $0x68] sm:$0xff]
    %v81 = vld [vmem:[#allocation2 + $0x70] sm:$0xff]
    %v82 = vld [vmem:[#allocation2 + $0x78] sm:$0xff]
    %v83 = vld [vmem:[#allocation2 + $0x80] sm:$0xff]
    %v84 = vld [vmem:[#allocation2 + $0x88] sm:$0xff]
    %v85 = vld [vmem:[#allocation2 + $0x90] sm:$0xff]
    %v86 = vld [vmem:[#allocation2 + $0x98] sm:$0xff]
    %v87 = vld [vmem:[#allocation2 + $0xa0] sm:$0xff]
    %v88 = vld [vmem:[#allocation2 + $0xa8] sm:$0xff]
    %v89 = vld [vmem:[#allocation2 + $0xb0] sm:$0xff]
    %v90 = vld [vmem:[#allocation2 + $0xb8] sm:$0xff]
    %v91 = vld [vmem:[#allocation2 + $0xc0] sm:$0xff]
    %v92 = vld [vmem:[#allocation2 + $0xc8] sm:$0xff]
    %v93 = vld [vmem:[#allocation2 + $0xd0] sm:$0xff]
    %v94 = vld [vmem:[#allocation2 + $0xd8] sm:$0xff]
    %v95 = vld [vmem:[#allocation2 + $0xe0] sm:$0xff]
    %v96 = vld [vmem:[#allocation2 + $0xe8] sm:$0xff]
    %v97 = vld [vmem:[#allocation2 + $0xf0] sm:$0xff]
    %v98 = vld [vmem:[#allocation2 + $0xf8] sm:$0xff]
    %v99 = vpack.c.bf16 %v69, %v67
    %v100 = vpack.c.bf16 %v70, %v68
    %v101 = vpack.c.bf16 %v73, %v71
    %v102 = vpack.c.bf16 %v74, %v72
    %v103 = vpack.c.bf16 %v77, %v75
    %v104 = vpack.c.bf16 %v78, %v76
    %v105 = vpack.c.bf16 %v81, %v79
    %v106 = vpack.c.bf16 %v82, %v80
    %v107 = vpack.c.bf16 %v85, %v83
    %v108 = vpack.c.bf16 %v86, %v84
    %v109 = vpack.c.bf16 %v89, %v87
    %v110 = vpack.c.bf16 %v90, %v88
    %v111 = vpack.c.bf16 %v93, %v91
    %v112 = vpack.c.bf16 %v94, %v92
    %v113 = vpack.c.bf16 %v97, %v95
    %v114 = vpack.c.bf16 %v98, %v96
    %v115 = vld [vmem:[#allocation6] sm:$0xf]
    %v116 = vld [vmem:[#allocation6 + $0x4] sm:$0xf]
    %v117 = vld [vmem:[#allocation6 + $0x8] sm:$0xf]
    %v118 = vld [vmem:[#allocation6 + $0xc] sm:$0xf]
    %v119 = vld [vmem:[#allocation6 + $0x10] sm:$0xf]
    %v120 = vld [vmem:[#allocation6 + $0x14] sm:$0xf]
    %v121 = vld [vmem:[#allocation6 + $0x18] sm:$0xf]
    %v122 = vld [vmem:[#allocation6 + $0x1c] sm:$0xf]
    %v123 = vld [vmem:[#allocation6 + $0x20] sm:$0xf]
    %v124 = vld [vmem:[#allocation6 + $0x24] sm:$0xf]
    %v125 = vld [vmem:[#allocation6 + $0x28] sm:$0xf]
    %v126 = vld [vmem:[#allocation6 + $0x2c] sm:$0xf]
    %v127 = vld [vmem:[#allocation6 + $0x30] sm:$0xf]
    %v128 = vld [vmem:[#allocation6 + $0x34] sm:$0xf]
    %v129 = vld [vmem:[#allocation6 + $0x38] sm:$0xf]
    %v130 = vld [vmem:[#allocation6 + $0x3c] sm:$0xf]
    %v131 = vld [vmem:[#allocation6 + $0x40] sm:$0xf]
    %v132 = vld [vmem:[#allocation6 + $0x44] sm:$0xf]
    %v133 = vld [vmem:[#allocation6 + $0x48] sm:$0xf]
    %v134 = vld [vmem:[#allocation6 + $0x4c] sm:$0xf]
    %v135 = vld [vmem:[#allocation6 + $0x50] sm:$0xf]
    %v136 = vld [vmem:[#allocation6 + $0x54] sm:$0xf]
    %v137 = vld [vmem:[#allocation6 + $0x58] sm:$0xf]
    %v138 = vld [vmem:[#allocation6 + $0x5c] sm:$0xf]
    %v139 = vld [vmem:[#allocation6 + $0x60] sm:$0xf]
    %v140 = vld [vmem:[#allocation6 + $0x64] sm:$0xf]
    %v141 = vld [vmem:[#allocation6 + $0x68] sm:$0xf]
    %v142 = vld [vmem:[#allocation6 + $0x6c] sm:$0xf]
    %v143 = vld [vmem:[#allocation6 + $0x70] sm:$0xf]
    %v144 = vld [vmem:[#allocation6 + $0x74] sm:$0xf]
    %v145 = vld [vmem:[#allocation6 + $0x78] sm:$0xf]
    %v146 = vld [vmem:[#allocation6 + $0x7c] sm:$0xf]
    %v179 = vunpack.c.l.b16 %v115
    %v180 = vunpack.c.l.b16 %v116
    %v181 = vunpack.c.l.b16 %v117
    %v182 = vunpack.c.l.b16 %v118
    %v183 = vunpack.c.l.b16 %v119
    %v184 = vunpack.c.l.b16 %v120
    %v185 = vunpack.c.l.b16 %v121
    %v186 = vunpack.c.l.b16 %v122
    %v187 = vunpack.c.l.b16 %v123
    %v188 = vunpack.c.l.b16 %v124
    %v189 = vunpack.c.l.b16 %v125
    %v190 = vunpack.c.l.b16 %v126
    %v191 = vunpack.c.l.b16 %v127
    %v192 = vunpack.c.l.b16 %v128
    %v193 = vunpack.c.l.b16 %v129
    %v194 = vunpack.c.l.b16 %v130
    %v195 = vunpack.c.l.b16 %v131
    %v196 = vunpack.c.l.b16 %v132
    %v197 = vunpack.c.l.b16 %v133
    %v198 = vunpack.c.l.b16 %v134
    %v199 = vunpack.c.l.b16 %v135
    %v200 = vunpack.c.l.b16 %v136
    %v201 = vunpack.c.l.b16 %v137
    %v202 = vunpack.c.l.b16 %v138
    %v203 = vunpack.c.l.b16 %v139
    %v204 = vunpack.c.l.b16 %v140
    %v205 = vunpack.c.l.b16 %v141
    %v206 = vunpack.c.l.b16 %v142
    %v207 = vunpack.c.l.b16 %v143
    %v208 = vunpack.c.l.b16 %v144
    %v209 = vunpack.c.l.b16 %v145
    %v210 = vunpack.c.l.b16 %v146
    %v211 = vpack.c.b16 %v180, %v179
    %v212 = vpack.c.b16 %v182, %v181
    %v213 = vpack.c.b16 %v184, %v183
    %v214 = vpack.c.b16 %v186, %v185
    %v215 = vpack.c.b16 %v188, %v187
    %v216 = vpack.c.b16 %v190, %v189
    %v217 = vpack.c.b16 %v192, %v191
    %v218 = vpack.c.b16 %v194, %v193
    %v219 = vpack.c.b16 %v196, %v195
    %v220 = vpack.c.b16 %v198, %v197
    %v221 = vpack.c.b16 %v200, %v199
    %v222 = vpack.c.b16 %v202, %v201
    %v223 = vpack.c.b16 %v204, %v203
    %v224 = vpack.c.b16 %v206, %v205
    %v225 = vpack.c.b16 %v208, %v207
    %v226 = vpack.c.b16 %v210, %v209
    %243 = vmatprep.subr.bf16.mxu0 0
    %244 = vmatpush1.bf16.msra.mxu0 %v211
    %245 = vmatprep.subr.bf16.mxu0 0
    %246 = vmatpush1.bf16.msra.mxu0 %v212
    %247 = vmatprep.subr.bf16.mxu0 0
    %248 = vmatpush1.bf16.msra.mxu0 %v213
    %249 = vmatprep.subr.bf16.mxu0 0
    %250 = vmatpush1.bf16.msra.mxu0 %v214
    %251 = vmatprep.subr.bf16.mxu0 0
    %252 = vmatpush1.bf16.msra.mxu0 %v215
    %253 = vmatprep.subr.bf16.mxu0 0
    %254 = vmatpush1.bf16.msra.mxu0 %v216
    %255 = vmatprep.subr.bf16.mxu0 0
    %256 = vmatpush1.bf16.msra.mxu0 %v217
    %257 = vmatprep.subr.bf16.mxu0 0
    %258 = vmatpush1.bf16.msra.mxu0 %v218
    %259 = vmatprep.subr.bf16.mxu0 0
    %260 = vmatpush1.bf16.msra.mxu0 %v219
    %261 = vmatprep.subr.bf16.mxu0 0
    %262 = vmatpush1.bf16.msra.mxu0 %v220
    %263 = vmatprep.subr.bf16.mxu0 0
    %264 = vmatpush1.bf16.msra.mxu0 %v221
    %265 = vmatprep.subr.bf16.mxu0 0
    %266 = vmatpush1.bf16.msra.mxu0 %v222
    %267 = vmatprep.subr.bf16.mxu0 0
    %268 = vmatpush1.bf16.msra.mxu0 %v223
    %269 = vmatprep.subr.bf16.mxu0 0
    %270 = vmatpush1.bf16.msra.mxu0 %v224
    %271 = vmatprep.subr.bf16.mxu0 0
    %272 = vmatpush1.bf16.msra.mxu0 %v225
    %273 = vmatprep.subr.bf16.mxu0 0
    %274 = vmatpush1.bf16.msra.mxu0 %v226
    %275 = vmatprep.mubr.bf16.mxu0 %v100
    %276 = vmatmul.mubr.bf16.gmra.mrb[0].mxu0 %v99
    %v277 = vpop.f32.mrb[0].mxu0
    %v278 = vadd.f32 0.0, %v277
    %v279 = vpop.f32.mrb[0].mxu0
    %v280 = vpop.f32.mrb[0].mxu0
    %v281 = vadd.f32 0.0, %v280
    %v282 = vpop.f32.mrb[0].mxu0
    %283 = vmatprep.mubr.bf16.mxu0 %v102
    %284 = vmatmul.mubr.bf16.gmra.mrb[0].mxu0 %v101
    %v285 = vpop.f32.mrb[0].mxu0
    %v286 = vadd.f32 0.0, %v285
    %v287 = vpop.f32.mrb[0].mxu0
    %v288 = vpop.f32.mrb[0].mxu0
    %v289 = vadd.f32 0.0, %v288
    %v290 = vpop.f32.mrb[0].mxu0
    %291 = vmatprep.mubr.bf16.mxu0 %v104
    %292 = vmatmul.mubr.bf16.gmra.mrb[0].mxu0 %v103
    %v293 = vpop.f32.mrb[0].mxu0
    %v294 = vadd.f32 0.0, %v293
    %v295 = vpop.f32.mrb[0].mxu0
    %v296 = vpop.f32.mrb[0].mxu0
    %v297 = vadd.f32 0.0, %v296
    %v298 = vpop.f32.mrb[0].mxu0
    %299 = vmatprep.mubr.bf16.mxu0 %v106
    %300 = vmatmul.mubr.bf16.gmra.mrb[0].mxu0 %v105
    %v301 = vpop.f32.mrb[0].mxu0
    %v302 = vadd.f32 0.0, %v301
    %v303 = vpop.f32.mrb[0].mxu0
    %v304 = vpop.f32.mrb[0].mxu0
    %v305 = vadd.f32 0.0, %v304
    %v306 = vpop.f32.mrb[0].mxu0
    %307 = vmatprep.mubr.bf16.mxu0 %v108
    %308 = vmatmul.mubr.bf16.gmra.mrb[0].mxu0 %v107
    %v309 = vpop.f32.mrb[0].mxu0
    %v310 = vadd.f32 0.0, %v309
    %v311 = vpop.f32.mrb[0].mxu0
    %v312 = vpop.f32.mrb[0].mxu0
    %v313 = vadd.f32 0.0, %v312
    %v314 = vpop.f32.mrb[0].mxu0
    %315 = vmatprep.mubr.bf16.mxu0 %v110
    %316 = vmatmul.mubr.bf16.gmra.mrb[0].mxu0 %v109
    %v317 = vpop.f32.mrb[0].mxu0
    %v318 = vadd.f32 0.0, %v317
    %v319 = vpop.f32.mrb[0].mxu0
    %v320 = vpop.f32.mrb[0].mxu0
    %v321 = vadd.f32 0.0, %v320
    %v322 = vpop.f32.mrb[0].mxu0
    %323 = vmatprep.mubr.bf16.mxu0 %v112
    %324 = vmatmul.mubr.bf16.gmra.mrb[0].mxu0 %v111
    %v325 = vpop.f32.mrb[0].mxu0
    %v326 = vadd.f32 0.0, %v325
    %v327 = vpop.f32.mrb[0].mxu0
    %v328 = vpop.f32.mrb[0].mxu0
    %v329 = vadd.f32 0.0, %v328
    %v330 = vpop.f32.mrb[0].mxu0
    %331 = vmatprep.mubr.bf16.mxu0 %v114
    %332 = vmatmul.mubr.bf16.gmra.mrb[0].mxu0 %v113
    %v333 = vpop.f32.mrb[0].mxu0
    %v334 = vadd.f32 0.0, %v333
    %v335 = vpop.f32.mrb[0].mxu0
    %v336 = vpop.f32.mrb[0].mxu0
    %v337 = vadd.f32 0.0, %v336
    %v338 = vpop.f32.mrb[0].mxu0
    %339 = vdwg.mxu0
    %340 = vst [vmem:[#allocation9] sm:$0xff] %v278
    %341 = vst [vmem:[#allocation9 + $0x8] sm:$0xff] %v281
    %342 = vst [vmem:[#allocation9 + $0x10] sm:$0xff] %v286
    %343 = vst [vmem:[#allocation9 + $0x18] sm:$0xff] %v289
    %344 = vst [vmem:[#allocation9 + $0x20] sm:$0xff] %v294
    %345 = vst [vmem:[#allocation9 + $0x28] sm:$0xff] %v297
    %346 = vst [vmem:[#allocation9 + $0x30] sm:$0xff] %v302
    %347 = vst [vmem:[#allocation9 + $0x38] sm:$0xff] %v305
    %348 = vst [vmem:[#allocation9 + $0x40] sm:$0xff] %v310
    %349 = vst [vmem:[#allocation9 + $0x48] sm:$0xff] %v313
    %350 = vst [vmem:[#allocation9 + $0x50] sm:$0xff] %v318
    %351 = vst [vmem:[#allocation9 + $0x58] sm:$0xff] %v321
    %352 = vst [vmem:[#allocation9 + $0x60] sm:$0xff] %v326
    %353 = vst [vmem:[#allocation9 + $0x68] sm:$0xff] %v329
    %354 = vst [vmem:[#allocation9 + $0x70] sm:$0xff] %v334
    %355 = vst [vmem:[#allocation9 + $0x78] sm:$0xff] %v337
    // Predicated region
    $region28: #{tpu_custom_call.1} parent=1 // pred_check
      _
    $region29: #{tpu_custom_call.1} parent=1 // pred_check_branch
      %357 = sbr.rel (0) target = $region31
    $region30: #{tpu_custom_call.1} parent=1 // pred_region
      %s359 = ssub.s32 2048, 2048
      %360 = vsyncadd [#allocation8], %s359
      %s361 = sshll.u32 [#allocation9], 4
      %s362 = int_to_ptr.vmem [resolvable:$true] %s361
      %367 = dma.vmem_to_hbm [thread:$0]  %s362, 2048, %s3, [#allocation8], 128, 128, 8
    $region31: #{tpu_custom_call.1} parent=1 // pred_fallthru
      _
    // Predicated region
    $region32: #{tpu_custom_call.1} parent=1 // pred_check
      _
    $region33: #{tpu_custom_call.1} parent=1 // pred_check_branch
      %369 = sbr.rel (0) target = $region35
    $region34: #{tpu_custom_call.1} parent=1 // pred_region
      %370 = dma.done [#allocation8], 2048
    $region35: #{tpu_custom_call.1} parent=1 // pred_fallthru
      _
    %371 = vsyncpa [#allocation7], 1
    %372 = vsyncpa [#allocation8], 1
  %373 = vsyncmov [#allocation3]
  %s374 = vpop.sfrf %373
  %p375 = scmp.eq.s32.totalorder %s374, 0
  %p376 = pneg %p375
  %378 = shalt.err (%p376)

</llo_original>
